<compile_context>
chip_gen: v5e
topology: v5e:2x2
jax: 0.10.0
libtpu: 0.0.40
codegen_flags: <defaults>
</compile_context>

<pallas_src>
import functools

import jax
import jax.numpy as jnp
from jax import lax
from jax.experimental import pallas as pl
from jax.experimental.pallas import tpu as pltpu

_LANES = 128
_SUBLANES = 8
_SINGLE_SHOT_MAX_ROWS = 4096   # (4096, 128) f32 slab = 2 MiB -> one-shot kernel
_TILE_ROWS = 2048              # (2048, 128) f32 tile = 1 MiB per pipeline buffer


def _valid_mask(shape, row_offset, n_valid):
    """Boolean mask of flat element indices < n_valid for a (rows, lanes) tile."""
    rows, lanes = shape
    row_ids = lax.broadcasted_iota(jnp.int32, shape, 0) + row_offset
    col_ids = lax.broadcasted_iota(jnp.int32, shape, 1)
    return (row_ids * lanes + col_ids) < n_valid


def _softmax_single_kernel(x_ref, o_ref, *, n_valid, apply_mask):
    """One-shot path: whole (padded) array lives in a single VMEM block."""
    x = x_ref[...].astype(jnp.float32)          # native-dtype HBM read, f32 math
    e = jnp.exp(x)                              # EUP (no max-subtraction, per spec)

    if apply_mask:                              # static Python bool (ragged tail)
        e_sum = jnp.where(_valid_mask(e.shape, 0, n_valid), e, 0.0)
    else:
        e_sum = e

    lane_sums = jnp.sum(e_sum, axis=-1, keepdims=True)        # (rows, 1)
    denom = jnp.sum(lane_sums, axis=0, keepdims=True)         # (1, 1)

    inv = pl.reciprocal(denom, approx=True)                   # EUP vrcp
    inv = inv * (2.0 - denom * inv)                           # Newton -> f32 accuracy
    o_ref[...] = (e * inv).astype(o_ref.dtype)


def _softmax_fused_kernel(x_ref, o_ref, acc_ref, *, n_valid, apply_mask, block_rows):
    """Fused two-phase path: phase 0 = global sum, phase 1 = scale + write."""
    p = pl.program_id(0)        # 0: reduction phase, 1: scaling phase
    t = pl.program_id(1)        # row-tile index

    x = x_ref[...].astype(jnp.float32)
    e = jnp.exp(x)              # needed in both phases; recompute beats HBM round-trip

    @pl.when((p == 0) & (t == 0))
    def _init():
        acc_ref[...] = jnp.zeros_like(acc_ref)

    @pl.when(p == 0)
    def _accumulate():
        if apply_mask:          # ragged tail / partial last block contributes 0
            masked = jnp.where(_valid_mask(e.shape, t * block_rows, n_valid), e, 0.0)
        else:
            masked = e
        lane_sums = jnp.sum(masked, axis=-1, keepdims=True)            # (br, 1)
        acc_ref[...] += jnp.sum(lane_sums, axis=0, keepdims=True)       # (1, 1)

    @pl.when(p == 1)
    def _scale():
        d = acc_ref[...]
        inv = pl.reciprocal(d, approx=True)
        inv = inv * (2.0 - d * inv)                                     # Newton step
        o_ref[...] = (e * inv).astype(o_ref.dtype)


@jax.jit
def global_softmax(x):
    """exp(x) / sum(exp(x)) over all elements; same shape/dtype as x."""
    orig_shape = x.shape
    orig_dtype = x.dtype

    flat = x.reshape(-1)
    n = flat.shape[0]

    # Pad (with zeros, masked in-kernel) only up to the next (8*128) boundary.
    tile_elems = _SUBLANES * _LANES
    padded_n = pl.cdiv(n, tile_elems) * tile_elems
    if padded_n != n:
        flat = jnp.pad(flat, (0, padded_n - n))

    rows = padded_n // _LANES
    slab = flat.reshape(rows, _LANES)           # lane-dense, rows % 8 == 0

    if rows <= _SINGLE_SHOT_MAX_ROWS:
        # ---- Fast path: everything in one VMEM block (2N HBM traffic). ----
        out = pl.pallas_call(
            functools.partial(
                _softmax_single_kernel, n_valid=n, apply_mask=(padded_n != n)
            ),
            grid=(1,),
            out_shape=jax.ShapeDtypeStruct((rows, _LANES), orig_dtype),
            in_specs=[pl.BlockSpec((rows, _LANES), lambda i: (0, 0))],
            out_specs=pl.BlockSpec((rows, _LANES), lambda i: (0, 0)),
            compiler_params=pltpu.CompilerParams(
                dimension_semantics=("arbitrary",)
            ),
        )(slab)
    else:
        # ---- Fused two-phase pipeline (3N HBM traffic, one launch). ----
        block_rows = _TILE_ROWS
        num_tiles = pl.cdiv(rows, block_rows)
        apply_mask = (padded_n != n) or (rows % block_rows != 0)
        # TODO(synk): on v7x, shard the tile axis of each phase across the two
        # TensorCores with per-core partial sums + a cross-core combine.
        out = pl.pallas_call(
            functools.partial(
                _softmax_fused_kernel,
                n_valid=n,
                apply_mask=apply_mask,
                block_rows=block_rows,
            ),
            grid=(2, num_tiles),
            out_shape=jax.ShapeDtypeStruct((rows, _LANES), orig_dtype),
            in_specs=[pl.BlockSpec((block_rows, _LANES), lambda p, t: (t, 0))],
            # Phase 0: output pinned to block 0 (never written, never flushed).
            # Phase 1: normal per-tile output blocks.
            out_specs=pl.BlockSpec((block_rows, _LANES), lambda p, t: (t * p, 0)),
            scratch_shapes=[pltpu.VMEM((1, 1), jnp.float32)],
            compiler_params=pltpu.CompilerParams(
                dimension_semantics=("arbitrary", "arbitrary")
            ),
        )(slab)

    result = out.reshape(-1)
    if padded_n != n:
        result = result[:n]
    return result.reshape(orig_shape)


def _reference(x):
    e = jnp.exp(x.astype(jnp.float32))
    return (e / jnp.sum(e)).astype(x.dtype)


if __name__ == "__main__":
    key = jax.random.PRNGKey(0)

    # Primary small NCHW-style input consistent with a generic forward(x).
    x = jax.random.normal(key, (2, 4, 16, 16), dtype=jnp.float32)
    y = jax.block_until_ready(global_softmax(x))
    assert y.shape == x.shape and y.dtype == x.dtype
    assert jnp.allclose(y, _reference(x), atol=1e-6, rtol=1e-5)

    # Ragged size (exercises the in-kernel tail mask, single-shot path).
    x2 = jax.random.normal(jax.random.PRNGKey(1), (3, 5, 7, 11), dtype=jnp.float32)
    y2 = jax.block_until_ready(global_softmax(x2))
    assert jnp.allclose(y2, _reference(x2), atol=1e-6, rtol=1e-5)

    # Largest single-shot size (2048 x 128 slab, exactly at one VMEM tile).
    x3 = jax.random.normal(jax.random.PRNGKey(2), (8, 32, 32, 32), dtype=jnp.float32)
    y3 = jax.block_until_ready(global_softmax(x3))
    assert jnp.allclose(y3, _reference(x3), atol=1e-6, rtol=1e-5)

    # Ragged multi-tile size (exercises the fused two-phase pipeline,
    # grid accumulation, partial last block and tail mask).
    x4 = jax.random.normal(jax.random.PRNGKey(3), (3, 97, 53, 67), dtype=jnp.float32)
    y4 = jax.block_until_ready(global_softmax(x4))
    assert jnp.allclose(y4, _reference(x4), atol=1e-6, rtol=1e-5)

    print("KERNEL_OK")
</pallas_src>

<mosaic_0001>
module attributes {stable_mosaic.version = 11 : i64} {
  func.func @_softmax_single_kernel(%arg0: i32, %arg1: memref<16x128xf32, #tpu.memory_space<vmem>>, %arg2: memref<16x128xf32, #tpu.memory_space<vmem>>) attributes {dimension_semantics = [#tpu.dimension_semantics<arbitrary>], iteration_bounds = array<i64: 1>, scalar_prefetch = 0 : i64, scratch_operands = 0 : i64, tpu.core_type = #tpu.core_type<tc>, window_params = [{pipeline_mode = #tpu.pipeline_mode<synchronous>, transform_indices = @transform_0, window_bounds = array<i64: 16, 128>}, {pipeline_mode = #tpu.pipeline_mode<synchronous>, transform_indices = @transform_1, window_bounds = array<i64: 16, 128>}]} {
    %c0 = arith.constant 0 : index
    %c0_0 = arith.constant 0 : index
    %0 = vector.load %arg1[%c0, %c0_0] : memref<16x128xf32, #tpu.memory_space<vmem>>, vector<16x128xf32>
    %1 = math.exp %0 : vector<16x128xf32>
    %cst = arith.constant dense<0.000000e+00> : vector<16xf32>
    %2 = vector.multi_reduction <add>, %1, %cst [1] : vector<16x128xf32> to vector<16xf32>
    %3 = vector.shape_cast %2 : vector<16xf32> to vector<16x1xf32>
    %cst_1 = arith.constant dense<0.000000e+00> : vector<1xf32>
    %4 = vector.multi_reduction <add>, %3, %cst_1 [0] : vector<16x1xf32> to vector<1xf32>
    %5 = vector.shape_cast %4 : vector<1xf32> to vector<1x1xf32>
    %6 = tpu.reciprocal %5 {approx = true} : vector<1x1xf32> -> vector<1x1xf32>
    %7 = arith.mulf %5, %6 : vector<1x1xf32>
    %cst_2 = arith.constant 2.000000e+00 : f32
    %8 = vector.broadcast %cst_2 : f32 to vector<1x1xf32>
    %9 = arith.subf %8, %7 : vector<1x1xf32>
    %10 = arith.mulf %6, %9 : vector<1x1xf32>
    %11 = vector.broadcast %10 : vector<1x1xf32> to vector<16x128xf32>
    %12 = arith.mulf %1, %11 : vector<16x128xf32>
    %c0_3 = arith.constant 0 : index
    %c0_4 = arith.constant 0 : index
    %13 = vector.load %arg2[%c0_3, %c0_4] : memref<16x128xf32, #tpu.memory_space<vmem>>, vector<16x128xf32>
    tpu.vector_store %arg2[%c0_3, %c0_4], %12 {strides = array<i32>} : memref<16x128xf32, #tpu.memory_space<vmem>>, vector<16x128xf32>,
    return
  }
  func.func @transform_0(%arg0: i32) -> (i32, i32) {
    %c0_i32 = arith.constant 0 : i32
    %c0_i32_0 = arith.constant 0 : i32
    %c0_i32_1 = arith.constant 0 : i32
    return %c0_i32, %c0_i32_0 : i32, i32
  }
  func.func @transform_1(%arg0: i32) -> (i32, i32) {
    %c0_i32 = arith.constant 0 : i32
    %c0_i32_0 = arith.constant 0 : i32
    %c0_i32_1 = arith.constant 0 : i32
    return %c0_i32, %c0_i32_0 : i32, i32
  }
}

</mosaic_0001>

<llo_original>
// kernel: global_softmax.1
$region0: #{global_softmax.1}
  #allocation0 [shape = 'u32[]', space=smem, size = 0x4, offset = 0x4, fixed_abs, tag = 'smem constant byte address 0x4 - core index']
  #allocation1 [shape = 'u32[72,128]{1,0:T(1,128)}', space=vmem, size = 0x9000, scoped, tag = 'internal scratch']
  %s0 = inlined_call_operand.vmem [shape: f32[16,128], index: 0, kind: input, shape index: {}]
  %s1 = inlined_call_operand.vmem [shape: f32[16,128], index: 1, kind: output, shape index: {}]
  %s2 = sld [smem:[#allocation0]]
  $region14: #{global_softmax.1} parent=0
    _
  %s4 = ssub.s32 1, %s2
  %s5 = scalar_select 0, %s4, %s2
  // Predicated region
  $region2: #{global_softmax.1} parent=0 // pred_check
    _
  $region3: #{global_softmax.1} parent=0 // pred_check_branch
    %7 = sbr.rel (0) target = $region5
  $region4: #{global_softmax.1} parent=0 // pred_region
    _
  $region5: #{global_softmax.1} parent=0 // pred_fallthru
    _
  %v8 = vld [vmem:[%s0] sm:$0xff]
  %v9 = vld [vmem:[%s0 + $0x8] sm:$0xff]
  %v10 = vmul.f32 %v8, 1.442695
  %v11 = vpow.pop %v10
  %v12 = vmul.f32 %v9, 1.442695
  %v13 = vpow.pop %v12
  %14 = vadd.xlane.f32.xlu0 %v11
  %v15 = vpop.xlane.xlu0 %14
  %16 = vadd.xlane.f32.xlu0 %v13
  %v17 = vpop.xlane.xlu0 %16
  %v18 = vadd.f32 %v15, %v17
  %v19 = vrot.slane %v18, 4
  %v20 = vadd.f32 %v18, %v19
  %v21 = vrot.slane %v20, 2
  %v22 = vadd.f32 %v20, %v21
  %v23 = vrot.slane %v22, 1
  %v24 = vadd.f32 %v22, %v23
  %v25 = vrcp.pop %v24
  %v26 = vmul.f32 %v24, %v25
  %v27 = vsub.f32 2.0, %v26
  %v28 = vmul.f32 %v25, %v27
  %v29 = vmul.f32 %v11, %v28
  %v30 = vmul.f32 %v13, %v28
  %31 = vst [vmem:[%s1] sm:$0xff] %v29
  %32 = vst [vmem:[%s1 + $0x8] sm:$0xff] %v30
  // Predicated region
  $region6: #{global_softmax.1} parent=0 // pred_check
    _
  $region7: #{global_softmax.1} parent=0 // pred_check_branch
    %34 = sbr.rel (0) target = $region9
  $region8: #{global_softmax.1} parent=0 // pred_region
    _
  $region9: #{global_softmax.1} parent=0 // pred_fallthru
    _
  // Predicated region
  $region10: #{global_softmax.1} parent=0 // pred_check
    _
  $region11: #{global_softmax.1} parent=0 // pred_check_branch
    %36 = sbr.rel (0) target = $region13
  $region12: #{global_softmax.1} parent=0 // pred_region
    _
  $region13: #{global_softmax.1} parent=0 // pred_fallthru
    _

</llo_original>
